<compile_context>
chip_gen: v6e
topology: v6e:2x2x1
jax: 0.10.0
libtpu: 0.0.40
codegen_flags: <defaults>
</compile_context>

<pallas_src>
import functools

import jax
import jax.numpy as jnp
from jax.experimental import pallas as pl
from jax.experimental.pallas import tpu as pltpu

EPS = 1e-5


def _image_proj_kernel(x_ref, w_ref, b_ref, g_ref, beta_ref, o_ref, acc_ref,
                       *, eps, inv_d):
    # grid = (T, E // tk); axis 1 is the E reduction (last, "arbitrary").
    k = pl.program_id(1)

    @pl.when(k == 0)
    def _init():
        acc_ref[...] = jnp.zeros_like(acc_ref)

    # Partial matmul: (B, tk) @ (tk, D) -> (B, D), bf16 inputs, f32 accumulation.
    x = x_ref[...].astype(jnp.bfloat16)        # tiny; cast on the VPU
    w = w_ref[0]                               # (tk, D) bf16, streamed per step
    acc_ref[...] += jnp.dot(x, w, preferred_element_type=jnp.float32)

    @pl.when(k == pl.num_programs(1) - 1)
    def _finalize():
        # Bias + LayerNorm over D, all in f32.  Params are read once here
        # (resident blocks, index_map constant across the grid).
        y = acc_ref[...] + b_ref[0]                                  # (B, D)
        mean = jnp.sum(y, axis=-1, keepdims=True) * inv_d            # 1/D const
        c = y - mean
        var = jnp.sum(c * c, axis=-1, keepdims=True) * inv_d
        yn = c * jax.lax.rsqrt(var + eps)
        o_ref[0] = (yn * g_ref[...] + beta_ref[...]).astype(o_ref.dtype)


def image_proj_model(image_embeds, w_t, b, gamma, beta, *, num_tokens, tk=None):
    """image_embeds: (B, E) f32; w_t: (E, T*D) (Linear weight transposed);
    b: (T*D,); gamma/beta: (D,).  Returns (B, T, D) f32."""
    B, E = image_embeds.shape
    T = num_tokens
    D = w_t.shape[1] // T
    if tk is None:
        tk = 128 if E % 128 == 0 else E
    assert E % tk == 0 and D % 128 == 0

    # One-time weight prep outside the kernel: token-major (T, E, D), bf16 stream.
    # (In a real deployment the weight would already live in HBM in this layout.)
    w_tok = w_t.reshape(E, T, D).transpose(1, 0, 2).astype(jnp.bfloat16)
    b_tok = b.reshape(T, 1, D).astype(jnp.float32)
    g2 = gamma.reshape(1, D).astype(jnp.float32)
    beta2 = beta.reshape(1, D).astype(jnp.float32)

    kernel = functools.partial(_image_proj_kernel, eps=EPS, inv_d=1.0 / D)

    out_tbd = pl.pallas_call(
        kernel,
        out_shape=jax.ShapeDtypeStruct((T, B, D), jnp.float32),
        grid_spec=pltpu.PrefetchScalarGridSpec(
            num_scalar_prefetch=0,
            grid=(T, E // tk),                     # tokens, then E reduction last
            in_specs=[
                pl.BlockSpec((B, tk), lambda t, k: (0, k)),        # x tile
                pl.BlockSpec((1, tk, D), lambda t, k: (t, k, 0)),  # W tile (bf16)
                pl.BlockSpec((1, 1, D), lambda t, k: (t, 0, 0)),   # bias[t]
                pl.BlockSpec((1, D), lambda t, k: (0, 0)),         # gamma (resident)
                pl.BlockSpec((1, D), lambda t, k: (0, 0)),         # beta  (resident)
            ],
            out_specs=pl.BlockSpec((1, B, D), lambda t, k: (t, 0, 0)),
            scratch_shapes=[pltpu.VMEM((B, D), jnp.float32)],      # f32 accumulator
        ),
        compiler_params=pltpu.CompilerParams(
            dimension_semantics=("parallel", "arbitrary"),   # token axis shards across TCs
            vmem_limit_bytes=32 * 1024 * 1024,
        ),
    )(image_embeds.astype(jnp.float32), w_tok, b_tok, g2, beta2)

    # Cheap layout glue: (T, B, D) -> (B, T, D), matching reshape(-1, T, D).
    return out_tbd.transpose(1, 0, 2)


if __name__ == "__main__":
    # Small shapes consistent with the module (defaults are E=768, D=1024, T=4).
    B, E, T, D = 2, 256, 4, 512

    key = jax.random.PRNGKey(0)
    k_x, k_w, k_b = jax.random.split(key, 3)

    x = jax.random.normal(k_x, (B, E), jnp.float32)
    bound = float(E) ** -0.5
    # PyTorch Linear weight is (out, in) = (T*D, E); store transposed (E, T*D).
    w_t = jax.random.uniform(k_w, (E, T * D), jnp.float32, -bound, bound)
    b = jax.random.uniform(k_b, (T * D,), jnp.float32, -bound, bound)
    gamma = jnp.ones((D,), jnp.float32)     # LayerNorm defaults
    beta = jnp.zeros((D,), jnp.float32)

    out = image_proj_model(x, w_t, b, gamma, beta, num_tokens=T)
    out = jax.block_until_ready(out)

    # Pure-JAX reference mirroring the kernel's bf16 weight/activation cast,
    # with f32 accumulation and f32 LayerNorm.
    xb = x.astype(jnp.bfloat16).astype(jnp.float32)
    wb = w_t.astype(jnp.bfloat16).astype(jnp.float32)
    y = (xb @ wb + b).reshape(B, T, D)
    mu = y.mean(-1, keepdims=True)
    var = ((y - mu) ** 2).mean(-1, keepdims=True)
    ref = (y - mu) * jax.lax.rsqrt(var + EPS) * gamma + beta

    assert out.shape == (B, T, D)
    assert jnp.allclose(out, ref, atol=1e-2, rtol=1e-2), float(
        jnp.max(jnp.abs(out - ref)))

    print("KERNEL_OK")
</pallas_src>

<mosaic_0001>
module attributes {stable_mosaic.version = 11 : i64} {
  func.func @_image_proj_kernel(%arg0: i32, %arg1: i32, %arg2: memref<2x128xf32, #tpu.memory_space<vmem>>, %arg3: memref<1x128x512xbf16, #tpu.memory_space<vmem>>, %arg4: memref<1x1x512xf32, #tpu.memory_space<vmem>>, %arg5: memref<1x512xf32, #tpu.memory_space<vmem>>, %arg6: memref<1x512xf32, #tpu.memory_space<vmem>>, %arg7: memref<1x2x512xf32, #tpu.memory_space<vmem>>, %arg8: memref<2x512xf32, #tpu.memory_space<vmem>>) attributes {dimension_semantics = [#tpu.dimension_semantics<parallel>, #tpu.dimension_semantics<arbitrary>], iteration_bounds = array<i64: 4, 2>, scalar_prefetch = 0 : i64, scratch_operands = 1 : i64, tpu.core_type = #tpu.core_type<tc>, window_params = [{transform_indices = @transform_0, window_bounds = array<i64: 2, 128>}, {transform_indices = @transform_1, window_bounds = array<i64: 1, 128, 512>}, {transform_indices = @transform_2, window_bounds = array<i64: 1, 1, 512>}, {pipeline_mode = #tpu.pipeline_mode<synchronous>, transform_indices = @transform_3, window_bounds = array<i64: 1, 512>}, {pipeline_mode = #tpu.pipeline_mode<synchronous>, transform_indices = @transform_4, window_bounds = array<i64: 1, 512>}, {transform_indices = @transform_5, window_bounds = array<i64: 1, 2, 512>}]} {
    %c0_i32 = arith.constant 0 : i32
    %0 = arith.cmpi eq, %arg1, %c0_i32 : i32
    %1 = arith.extui %0 : i1 to i32
    %c0_i32_0 = arith.constant 0 : i32
    %2 = arith.cmpi ne, %1, %c0_i32_0 : i32
    scf.if %2 {
      %cst_10 = arith.constant 0.000000e+00 : f32
      %14 = vector.broadcast %cst_10 : f32 to vector<2x512xf32>
      %c0_11 = arith.constant 0 : index
      %c0_12 = arith.constant 0 : index
      %15 = vector.load %arg8[%c0_11, %c0_12] : memref<2x512xf32, #tpu.memory_space<vmem>>, vector<2x512xf32>
      tpu.vector_store %arg8[%c0_11, %c0_12], %14 {strides = array<i32>} : memref<2x512xf32, #tpu.memory_space<vmem>>, vector<2x512xf32>,
    } else {
    }
    %c0 = arith.constant 0 : index
    %c0_1 = arith.constant 0 : index
    %3 = vector.load %arg2[%c0, %c0_1] : memref<2x128xf32, #tpu.memory_space<vmem>>, vector<2x128xf32>
    %4 = arith.truncf %3 : vector<2x128xf32> to vector<2x128xbf16>
    %c0_2 = arith.constant 0 : index
    %c0_3 = arith.constant 0 : index
    %c0_4 = arith.constant 0 : index
    %5 = vector.load %arg3[%c0_2, %c0_3, %c0_4] : memref<1x128x512xbf16, #tpu.memory_space<vmem>>, vector<1x128x512xbf16>
    %6 = vector.shape_cast %5 : vector<1x128x512xbf16> to vector<128x512xbf16>
    %c0_5 = arith.constant 0 : index
    %c0_6 = arith.constant 0 : index
    %7 = vector.load %arg8[%c0_5, %c0_6] : memref<2x512xf32, #tpu.memory_space<vmem>>, vector<2x512xf32>
    %cst = arith.constant dense<0.000000e+00> : vector<2x512xf32>
    %8 = tpu.matmul %4, %6, %cst {dimension_numbers = #tpu.dot_dimension_numbers<[1], [0], [0], [1], [0, 0, 1, 1], [], []>} : vector<2x128xbf16>, vector<128x512xbf16>, vector<2x512xf32> -> vector<2x512xf32>
    %9 = arith.addf %7, %8 : vector<2x512xf32>
    %c0_7 = arith.constant 0 : index
    %c0_8 = arith.constant 0 : index
    %10 = vector.load %arg8[%c0_7, %c0_8] : memref<2x512xf32, #tpu.memory_space<vmem>>, vector<2x512xf32>
    tpu.vector_store %arg8[%c0_7, %c0_8], %9 {strides = array<i32>} : memref<2x512xf32, #tpu.memory_space<vmem>>, vector<2x512xf32>,
    %c1_i32 = arith.constant 1 : i32
    %11 = arith.cmpi eq, %arg1, %c1_i32 : i32
    %12 = arith.extui %11 : i1 to i32
    %c0_i32_9 = arith.constant 0 : i32
    %13 = arith.cmpi ne, %12, %c0_i32_9 : i32
    scf.if %13 {
      %c0_10 = arith.constant 0 : index
      %c0_11 = arith.constant 0 : index
      %14 = vector.load %arg8[%c0_10, %c0_11] : memref<2x512xf32, #tpu.memory_space<vmem>>, vector<2x512xf32>
      %c0_12 = arith.constant 0 : index
      %c0_13 = arith.constant 0 : index
      %c0_14 = arith.constant 0 : index
      %15 = vector.load %arg4[%c0_12, %c0_13, %c0_14] : memref<1x1x512xf32, #tpu.memory_space<vmem>>, vector<1x1x512xf32>
      %16 = vector.shape_cast %15 : vector<1x1x512xf32> to vector<1x512xf32>
      %17 = vector.broadcast %16 : vector<1x512xf32> to vector<2x512xf32>
      %18 = arith.addf %14, %17 : vector<2x512xf32>
      %cst_15 = arith.constant dense<0.000000e+00> : vector<2xf32>
      %19 = vector.multi_reduction <add>, %18, %cst_15 [1] : vector<2x512xf32> to vector<2xf32>
      %20 = vector.shape_cast %19 : vector<2xf32> to vector<2x1xf32>
      %cst_16 = arith.constant 0.001953125 : f32
      %21 = vector.broadcast %cst_16 : f32 to vector<2x1xf32>
      %22 = arith.mulf %20, %21 : vector<2x1xf32>
      %23 = vector.broadcast %22 : vector<2x1xf32> to vector<2x512xf32>
      %24 = arith.subf %18, %23 : vector<2x512xf32>
      %25 = arith.mulf %24, %24 : vector<2x512xf32>
      %cst_17 = arith.constant dense<0.000000e+00> : vector<2xf32>
      %26 = vector.multi_reduction <add>, %25, %cst_17 [1] : vector<2x512xf32> to vector<2xf32>
      %27 = vector.shape_cast %26 : vector<2xf32> to vector<2x1xf32>
      %cst_18 = arith.constant 0.001953125 : f32
      %28 = vector.broadcast %cst_18 : f32 to vector<2x1xf32>
      %29 = arith.mulf %27, %28 : vector<2x1xf32>
      %cst_19 = arith.constant 9.99999974E-6 : f32
      %30 = vector.broadcast %cst_19 : f32 to vector<2x1xf32>
      %31 = arith.addf %29, %30 : vector<2x1xf32>
      %32 = math.rsqrt %31 : vector<2x1xf32>
      %33 = vector.broadcast %32 : vector<2x1xf32> to vector<2x512xf32>
      %34 = arith.mulf %24, %33 : vector<2x512xf32>
      %c0_20 = arith.constant 0 : index
      %c0_21 = arith.constant 0 : index
      %35 = vector.load %arg5[%c0_20, %c0_21] : memref<1x512xf32, #tpu.memory_space<vmem>>, vector<1x512xf32>
      %36 = vector.broadcast %35 : vector<1x512xf32> to vector<2x512xf32>
      %37 = arith.mulf %34, %36 : vector<2x512xf32>
      %c0_22 = arith.constant 0 : index
      %c0_23 = arith.constant 0 : index
      %38 = vector.load %arg6[%c0_22, %c0_23] : memref<1x512xf32, #tpu.memory_space<vmem>>, vector<1x512xf32>
      %39 = vector.broadcast %38 : vector<1x512xf32> to vector<2x512xf32>
      %40 = arith.addf %37, %39 : vector<2x512xf32>
      %c0_24 = arith.constant 0 : index
      %c0_25 = arith.constant 0 : index
      %c0_26 = arith.constant 0 : index
      %41 = vector.load %arg7[%c0_24, %c0_25, %c0_26] : memref<1x2x512xf32, #tpu.memory_space<vmem>>, vector<1x2x512xf32>
      %42 = vector.shape_cast %41 : vector<1x2x512xf32> to vector<2x512xf32>
      %43 = vector.shape_cast %40 : vector<2x512xf32> to vector<1x2x512xf32>
      tpu.vector_store %arg7[%c0_24, %c0_25, %c0_26], %43 {strides = array<i32>} : memref<1x2x512xf32, #tpu.memory_space<vmem>>, vector<1x2x512xf32>,
    } else {
    }
    return
  }
  func.func @transform_0(%arg0: i32, %arg1: i32) -> (i32, i32) {
    %c0_i32 = arith.constant 0 : i32
    %c0_i32_0 = arith.constant 0 : i32
    return %c0_i32, %arg1 : i32, i32
  }
  func.func @transform_1(%arg0: i32, %arg1: i32) -> (i32, i32, i32) {
    %c0_i32 = arith.constant 0 : i32
    %c0_i32_0 = arith.constant 0 : i32
    return %arg0, %arg1, %c0_i32 : i32, i32, i32
  }
  func.func @transform_2(%arg0: i32, %arg1: i32) -> (i32, i32, i32) {
    %c0_i32 = arith.constant 0 : i32
    %c0_i32_0 = arith.constant 0 : i32
    %c0_i32_1 = arith.constant 0 : i32
    return %arg0, %c0_i32, %c0_i32_0 : i32, i32, i32
  }
  func.func @transform_3(%arg0: i32, %arg1: i32) -> (i32, i32) {
    %c0_i32 = arith.constant 0 : i32
    %c0_i32_0 = arith.constant 0 : i32
    %c0_i32_1 = arith.constant 0 : i32
    return %c0_i32, %c0_i32_0 : i32, i32
  }
  func.func @transform_4(%arg0: i32, %arg1: i32) -> (i32, i32) {
    %c0_i32 = arith.constant 0 : i32
    %c0_i32_0 = arith.constant 0 : i32
    %c0_i32_1 = arith.constant 0 : i32
    return %c0_i32, %c0_i32_0 : i32, i32
  }
  func.func @transform_5(%arg0: i32, %arg1: i32) -> (i32, i32, i32) {
    %c0_i32 = arith.constant 0 : i32
    %c0_i32_0 = arith.constant 0 : i32
    %c0_i32_1 = arith.constant 0 : i32
    return %arg0, %c0_i32, %c0_i32_0 : i32, i32, i32
  }
}

</mosaic_0001>

<llo_original>
// kernel: tpu_custom_call.1
$region0: #{tpu_custom_call.1}
  #allocation0 [shape = 'u32[]', space=smem, size = 0x4, offset = 0x4, fixed_abs, tag = 'smem constant byte address 0x4 - core index']
  #allocation1 [shape = 'u32[144,128]{1,0:T(1,128)}', space=vmem, size = 0x12000, scoped, tag = 'internal scratch']
  #allocation2 [shape = 'f32[2,512]{1,0:T(2,128)}', space=vmem, size = 0x1000, scoped, tag = 'scratch operand']
  %s0 = inlined_call_operand.hbm [shape: f32[2,256], index: 0, kind: input, shape index: {}]
  %s1 = inlined_call_operand.hbm [shape: bf16[4,256,512], index: 1, kind: input, shape index: {}]
  %s2 = inlined_call_operand.hbm [shape: f32[4,1,512], index: 2, kind: input, shape index: {}]
  %s3 = inlined_call_operand.vmem [shape: f32[1,512], index: 3, kind: input, shape index: {}]
  %s4 = inlined_call_operand.hbm [shape: f32[1,512], index: 4, kind: input, shape index: {}]
  %s5 = inlined_call_operand.hbm [shape: f32[4,2,512], index: 5, kind: output, shape index: {}]
  %s6 = sld [smem:[#allocation0]]
  $region77: #{tpu_custom_call.1} parent=0
    _
  %s8 = ssub.s32 1, %s6
  %s9 = scalar_select 0, %s8, %s6
  $region1: #{tpu_custom_call.1} parent=0
    #allocation3 [shape = 'u8[2048]{0}', space=vmem, size = 0x800, scoped, tag = 'input window, operand 0']
    #allocation4 [shape = 's32[2]{0}', space=sflag, size = 0x8, scoped, tag = 'scoped memory for tpu_custom_call.1']
    #allocation5 [shape = 's32[2]{0}', space=sflag, size = 0x8, scoped, tag = 'scoped memory for tpu_custom_call.1']
    #allocation6 [shape = 'u8[262144]{0}', space=vmem, size = 0x40000, scoped, tag = 'input window, operand 1']
    #allocation7 [shape = 's32[2]{0}', space=sflag, size = 0x8, scoped, tag = 'scoped memory for tpu_custom_call.1']
    #allocation8 [shape = 'u8[4096]{0}', space=vmem, size = 0x1000, scoped, tag = 'input window, operand 2']
    #allocation9 [shape = 'u8[2048]{0}', space=vmem, size = 0x800, scoped, tag = 'input window, operand 4, single buffered']
    #allocation10 [shape = 's32[1]{0}', space=sflag, size = 0x4, scoped, tag = 'scoped memory for tpu_custom_call.1']
    #allocation11 [shape = 'u8[8192]{0}', space=vmem, size = 0x2000, scoped, tag = 'output window, operand 0']
    %10 = vsyncpa [#allocation4], 0
    %s11 = scalar_lea.sflag [#allocation4], 1
    %12 = vsyncpa %s11, 0
    %13 = vsyncpa [#allocation7], 0
    %s14 = scalar_lea.sflag [#allocation7], 1
    %15 = vsyncpa %s14, 0
    %16 = vsyncpa [#allocation10], 0
    %17 = vsyncpa [#allocation5], 0
    %s18 = scalar_lea.sflag [#allocation5], 1
    %19 = vsyncpa %s18, 0
    loop: start=0, step=1, limit=10
    $region2: #{tpu_custom_call.1} parent=1 // loop_pre_header
      _
    $region3: #{tpu_custom_call.1} parent=1 // loop_header
      %s21 = sphi 0, %s25
      %p22 = scmp.ge.s32.totalorder %s21, 10
      %s28 = sphi 0, %s40
      %s29 = sphi 0, %s36
      %s30 = sphi 0, %s28
      %s31 = sphi 0, %s29
      %s32 = sphi 0, %s30
      %s33 = sphi 0, %s31
      %s43 = sphi 0, %s45
      %s46 = sphi 0, %s43
      %s47 = sphi 0, %s46
      %s63 = sphi 0, %s47
      %s71 = sphi 0, %s73
      %s74 = sphi 0, %s71
      %s75 = sphi 0, %s74
      %s91 = sphi 0, %s75
      %s97 = sphi 0, %s99
      %s100 = sphi 0, %s97
      %s101 = sphi 0, %s100
      %s117 = sphi 0, %s101
      %s121 = sphi 0, %s121
      %s123 = sphi 0, %s121
      %s124 = sphi 0, %s123
      %s138 = sphi 0, %s124
      %s142 = sphi 0, %s142
      %s144 = sphi 0, %s142
      %s145 = sphi 0, %s144
      %s159 = sphi 0, %s145
      %s165 = sphi 0, %s167
      %s168 = sphi 0, %s165
      %s169 = sphi 0, %s168
      %s185 = sphi 0, %s169
    $region4: #{tpu_custom_call.1} parent=1 // loop_header_branch
      %24 = sbr.rel (%p22) target = $region8
    $region5: #{tpu_custom_call.1} parent=1 // loop_body
      %s26 = ssub.s32 %s21, 1
      %s27 = ssub.s32 %s21, 2
      %s34 = sadd.s32 1, %s29
      %p35 = scmp.ge.s32.totalorder %s34, 2
      %s36 = scalar_select %p35, 0, %s34
      %s37 = sadd.s32 1, %s28
      %s38 = scalar_select %p35, %s37, %s28
      %p39 = scmp.ge.s32.totalorder %s38, 4
      %s40 = scalar_select %p39, 0, %s38
      %s41 = ssub.s32 %s29, %s36
      %p42 = scmp.eq.s32.totalorder %s41, 0
      %s44 = sadd.s32 %s43, 1
      %s45 = scalar_select %p42, %s43, %s44
      %p48 = pneg %p42
      %p49 = scmp.eq.s32.totalorder %s21, 7
      %p50 = por %p48, %p49
      %p51 = scmp.ne.s32.totalorder %s43, %s46
      %p52 = scmp.eq.s32.totalorder %s21, 0
      %p53 = por %p51, %p52
      %p54 = scmp.ne.s32.totalorder %s43, %s46
      %p55 = scmp.eq.s32.totalorder %s26, 7
      %p56 = por %p54, %p55
      %p57 = scmp.ne.s32.totalorder %s46, %s47
      %p58 = scmp.eq.s32.totalorder %s26, 0
      %p59 = por %p57, %p58
      %p60 = scmp.ne.s32.totalorder %s46, %s47
      %p61 = scmp.eq.s32.totalorder %s27, 7
      %p62 = por %p60, %p61
      %p64 = scmp.ne.s32.totalorder %s47, %s63
      %p65 = scmp.eq.s32.totalorder %s27, 0
      %p66 = por %p64, %p65
      %s67 = ssub.s32 %s28, %s40
      %s68 = ssub.s32 %s29, %s36
      %s69 = sor.u32 %s67, %s68
      %p70 = scmp.eq.s32.totalorder %s69, 0
      %s72 = sadd.s32 %s71, 1
      %s73 = scalar_select %p70, %s71, %s72
      %p76 = pneg %p70
      %p77 = scmp.eq.s32.totalorder %s21, 7
      %p78 = por %p76, %p77
      %p79 = scmp.ne.s32.totalorder %s71, %s74
      %p80 = scmp.eq.s32.totalorder %s21, 0
      %p81 = por %p79, %p80
      %p82 = scmp.ne.s32.totalorder %s71, %s74
      %p83 = scmp.eq.s32.totalorder %s26, 7
      %p84 = por %p82, %p83
      %p85 = scmp.ne.s32.totalorder %s74, %s75
      %p86 = scmp.eq.s32.totalorder %s26, 0
      %p87 = por %p85, %p86
      %p88 = scmp.ne.s32.totalorder %s74, %s75
      %p89 = scmp.eq.s32.totalorder %s27, 7
      %p90 = por %p88, %p89
      %p92 = scmp.ne.s32.totalorder %s75, %s91
      %p93 = scmp.eq.s32.totalorder %s27, 0
      %p94 = por %p92, %p93
      %s95 = ssub.s32 %s28, %s40
      %p96 = scmp.eq.s32.totalorder %s95, 0
      %s98 = sadd.s32 %s97, 1
      %s99 = scalar_select %p96, %s97, %s98
      %p102 = pneg %p96
      %p103 = scmp.eq.s32.totalorder %s21, 7
      %p104 = por %p102, %p103
      %p105 = scmp.ne.s32.totalorder %s97, %s100
      %p106 = scmp.eq.s32.totalorder %s21, 0
      %p107 = por %p105, %p106
      %p108 = scmp.ne.s32.totalorder %s97, %s100
      %p109 = scmp.eq.s32.totalorder %s26, 7
      %p110 = por %p108, %p109
      %p111 = scmp.ne.s32.totalorder %s100, %s101
      %p112 = scmp.eq.s32.totalorder %s26, 0
      %p113 = por %p111, %p112
      %p114 = scmp.ne.s32.totalorder %s100, %s101
      %p115 = scmp.eq.s32.totalorder %s27, 7
      %p116 = por %p114, %p115
      %p118 = scmp.ne.s32.totalorder %s101, %s117
      %p119 = scmp.eq.s32.totalorder %s27, 0
      %p120 = por %p118, %p119
      %s122 = sadd.s32 %s121, 1
      %p125 = scmp.eq.s32.totalorder %s21, 7
      %p126 = scmp.ne.s32.totalorder %s121, %s123
      %p127 = scmp.eq.s32.totalorder %s21, 0
      %p128 = por %p126, %p127
      %p129 = scmp.ne.s32.totalorder %s121, %s123
      %p130 = scmp.eq.s32.totalorder %s26, 7
      %p131 = por %p129, %p130
      %p132 = scmp.ne.s32.totalorder %s123, %s124
      %p133 = scmp.eq.s32.totalorder %s26, 0
      %p134 = por %p132, %p133
      %p135 = scmp.ne.s32.totalorder %s123, %s124
      %p136 = scmp.eq.s32.totalorder %s27, 7
      %p137 = por %p135, %p136
      %p139 = scmp.ne.s32.totalorder %s124, %s138
      %p140 = scmp.eq.s32.totalorder %s27, 0
      %p141 = por %p139, %p140
      %s143 = sadd.s32 %s142, 1
      %p146 = scmp.eq.s32.totalorder %s21, 7
      %p147 = scmp.ne.s32.totalorder %s142, %s144
      %p148 = scmp.eq.s32.totalorder %s21, 0
      %p149 = por %p147, %p148
      %p150 = scmp.ne.s32.totalorder %s142, %s144
      %p151 = scmp.eq.s32.totalorder %s26, 7
      %p152 = por %p150, %p151
      %p153 = scmp.ne.s32.totalorder %s144, %s145
      %p154 = scmp.eq.s32.totalorder %s26, 0
      %p155 = por %p153, %p154
      %p156 = scmp.ne.s32.totalorder %s144, %s145
      %p157 = scmp.eq.s32.totalorder %s27, 7
      %p158 = por %p156, %p157
      %p160 = scmp.ne.s32.totalorder %s145, %s159
      %p161 = scmp.eq.s32.totalorder %s27, 0
      %p162 = por %p160, %p161
      %s163 = ssub.s32 %s28, %s40
      %p164 = scmp.eq.s32.totalorder %s163, 0
      %s166 = sadd.s32 %s165, 1
      %s167 = scalar_select %p164, %s165, %s166
      %p170 = pneg %p164
      %p171 = scmp.eq.s32.totalorder %s21, 7
      %p172 = por %p170, %p171
      %p173 = scmp.ne.s32.totalorder %s165, %s168
      %p174 = scmp.eq.s32.totalorder %s21, 0
      %p175 = por %p173, %p174
      %p176 = scmp.ne.s32.totalorder %s165, %s168
      %p177 = scmp.eq.s32.totalorder %s26, 7
      %p178 = por %p176, %p177
      %p179 = scmp.ne.s32.totalorder %s168, %s169
      %p180 = scmp.eq.s32.totalorder %s26, 0
      %p181 = por %p179, %p180
      %p182 = scmp.ne.s32.totalorder %s168, %s169
      %p183 = scmp.eq.s32.totalorder %s27, 7
      %p184 = por %p182, %p183
      %p186 = scmp.ne.s32.totalorder %s169, %s185
      %p187 = scmp.eq.s32.totalorder %s27, 0
      %p188 = por %p186, %p187
      %p189 = scmp.le.s32.totalorder 1, %s21
      %p190 = scmp.lt.s32.totalorder %s21, 9
      %p191 = pnand %p189, %p190
      %p192 = pneg %p191
      // Predicated region
      $region9: #{tpu_custom_call.1} parent=5 // pred_check
        _
      $region10: #{tpu_custom_call.1} parent=5 // pred_check_branch
        %194 = sbr.rel (%p191) target = $region12
      $region11: #{tpu_custom_call.1} parent=5 // pred_region
        %s195 = ssub.s32 %s21, 1
        // Predicated region
        $region13: #{tpu_custom_call.1} parent=11 // pred_check
          %p196 = pneg %p134
        $region14: #{tpu_custom_call.1} parent=11 // pred_check_branch
          %198 = sbr.rel (%p196) target = $region16
        $region15: #{tpu_custom_call.1} parent=11 // pred_region
          _
        $region16: #{tpu_custom_call.1} parent=11 // pred_fallthru
          _
        // Predicated region
        $region17: #{tpu_custom_call.1} parent=11 // pred_check
          %p199 = pneg %p155
        $region18: #{tpu_custom_call.1} parent=11 // pred_check_branch
          %201 = sbr.rel (%p199) target = $region20
        $region19: #{tpu_custom_call.1} parent=11 // pred_region
          %s203 = ssub.s32 64, 64
          %204 = vsyncadd [#allocation10], %s203
          %s206 = sshll.u32 [#allocation9], 4
          %s207 = int_to_ptr.vmem [resolvable:$true] %s206
          %209 = dma.hbm_to_vmem [thread:$0]  %s4, 64, %s207, [#allocation10]
        $region20: #{tpu_custom_call.1} parent=11 // pred_fallthru
          _
      $region12: #{tpu_custom_call.1} parent=5 // pred_fallthru
        _
      %p210 = scmp.lt.s32.totalorder %s21, 8
      // Predicated region
      $region21: #{tpu_custom_call.1} parent=5 // pred_check
        %p211 = pneg %p210
      $region22: #{tpu_custom_call.1} parent=5 // pred_check_branch
        %213 = sbr.rel (%p211) target = $region24
      $region23: #{tpu_custom_call.1} parent=5 // pred_region
        // Predicated region
        $region25: #{tpu_custom_call.1} parent=23 // pred_check
          %p214 = pneg %p53
        $region26: #{tpu_custom_call.1} parent=23 // pred_check_branch
          %216 = sbr.rel (%p214) target = $region28
        $region27: #{tpu_custom_call.1} parent=23 // pred_region
          %s217 = sand.u32 %s43, 1
          %s218 = scalar_lea.sflag [#allocation4], %s217
          %s219 = sand.u32 %s43, 1
          %s220 = smul.addr %s219, 2
          %s221 = scalar_lea.vmem [#allocation3], %s220
          %s223 = ssub.s32 32, 32
          %224 = vsyncadd %s218, %s223
          %s225 = smul.addr %s29, 32
          %s226 = scalar_lea.hbm %s0, %s225
          %s228 = sshll.u32 %s221, 4
          %s229 = int_to_ptr.vmem [resolvable:$true] %s228
          %231 = dma.hbm_to_vmem [thread:$0]  %s226, 32, %s229, %s218
        $region28: #{tpu_custom_call.1} parent=23 // pred_fallthru
          _
        // Predicated region
        $region29: #{tpu_custom_call.1} parent=23 // pred_check
          %p232 = pneg %p81
        $region30: #{tpu_custom_call.1} parent=23 // pred_check_branch
          %234 = sbr.rel (%p232) target = $region32
        $region31: #{tpu_custom_call.1} parent=23 // pred_region
          %s235 = sand.u32 %s21, 1
          %s236 = scalar_lea.sflag [#allocation7], %s235
          %s237 = sand.u32 %s71, 1
          %s238 = smul.addr %s237, 256
          %s239 = scalar_lea.vmem [#allocation6], %s238
          %s240 = smul.u32 16, %s29
          %s242 = ssub.s32 4096, 4096
          %243 = vsyncadd %s236, %s242
          %s244 = smul.addr %s240, 4
          %s245 = smul.addr %s28, 128
          %s246 = sadd.s32 %s244, %s245
          %s247 = smul.addr %s246, 64
          %s248 = scalar_lea.hbm %s1, %s247
          %s249 = sshll.u32 %s239, 4
          %s250 = int_to_ptr.vmem [resolvable:$true] %s249
          %255 = dma.hbm_to_vmem [thread:$0]  %s248, 4096, %s250, %s236, 256, 256, 16
        $region32: #{tpu_custom_call.1} parent=23 // pred_fallthru
          _
        // Predicated region
        $region33: #{tpu_custom_call.1} parent=23 // pred_check
          %p256 = pneg %p107
        $region34: #{tpu_custom_call.1} parent=23 // pred_check_branch
          %258 = sbr.rel (%p256) target = $region36
        $region35: #{tpu_custom_call.1} parent=23 // pred_region
          %s259 = sand.u32 %s21, 1
          %s260 = scalar_lea.sflag [#allocation7], %s259
          %s261 = sand.u32 %s97, 1
          %s262 = smul.addr %s261, 4
          %s263 = scalar_lea.vmem [#allocation8], %s262
          %s265 = ssub.s32 64, 64
          %266 = vsyncadd %s260, %s265
          %s267 = smul.addr %s28, 4
          %s268 = smul.addr %s267, 16
          %s269 = scalar_lea.hbm %s2, %s268
          %s271 = sshll.u32 %s263, 4
          %s272 = int_to_ptr.vmem [resolvable:$true] %s271
          %274 = dma.hbm_to_vmem [thread:$0]  %s269, 64, %s272, %s260
        $region36: #{tpu_custom_call.1} parent=23 // pred_fallthru
          _
      $region24: #{tpu_custom_call.1} parent=5 // pred_fallthru
        _
      %p275 = scmp.le.s32.totalorder 1, %s21
      %p276 = scmp.lt.s32.totalorder %s21, 9
      %p277 = pnand %p275, %p276
      %p278 = pneg %p277
      // Predicated region
      $region37: #{tpu_custom_call.1} parent=5 // pred_check
        _
      $region38: #{tpu_custom_call.1} parent=5 // pred_check_branch
        %280 = sbr.rel (%p277) target = $region40
      $region39: #{tpu_custom_call.1} parent=5 // pred_region
        %s281 = ssub.s32 %s21, 1
        %s282 = sand.u32 %s46, 1
        %s283 = scalar_lea.sflag [#allocation4], %s282
        %s284 = sand.u32 %s46, 1
        %s285 = smul.addr %s284, 2
        %s286 = scalar_lea.vmem [#allocation3], %s285
        // Predicated region
        $region41: #{tpu_custom_call.1} parent=39 // pred_check
          %p287 = pneg %p59
        $region42: #{tpu_custom_call.1} parent=39 // pred_check_branch
          %289 = sbr.rel (%p287) target = $region44
        $region43: #{tpu_custom_call.1} parent=39 // pred_region
          %290 = dma.done %s283, 32
        $region44: #{tpu_custom_call.1} parent=39 // pred_fallthru
          _
        %s291 = sand.u32 %s26, 1
        %s292 = scalar_lea.sflag [#allocation7], %s291
        %s293 = sand.u32 %s74, 1
        %s294 = smul.addr %s293, 256
        %s295 = scalar_lea.vmem [#allocation6], %s294
        // Predicated region
        $region45: #{tpu_custom_call.1} parent=39 // pred_check
          %p296 = pneg %p87
        $region46: #{tpu_custom_call.1} parent=39 // pred_check_branch
          %298 = sbr.rel (%p296) target = $region48
        $region47: #{tpu_custom_call.1} parent=39 // pred_region
          %299 = dma.done %s292, 4096
        $region48: #{tpu_custom_call.1} parent=39 // pred_fallthru
          _
        %s300 = sand.u32 %s26, 1
        %s301 = scalar_lea.sflag [#allocation7], %s300
        %s302 = sand.u32 %s100, 1
        %s303 = smul.addr %s302, 4
        %s304 = scalar_lea.vmem [#allocation8], %s303
        // Predicated region
        $region49: #{tpu_custom_call.1} parent=39 // pred_check
          %p305 = pneg %p113
        $region50: #{tpu_custom_call.1} parent=39 // pred_check_branch
          %307 = sbr.rel (%p305) target = $region52
        $region51: #{tpu_custom_call.1} parent=39 // pred_region
          %308 = dma.done %s301, 64
        $region52: #{tpu_custom_call.1} parent=39 // pred_fallthru
          _
        // Predicated region
        $region53: #{tpu_custom_call.1} parent=39 // pred_check
          %p309 = pneg %p155
        $region54: #{tpu_custom_call.1} parent=39 // pred_check_branch
          %311 = sbr.rel (%p309) target = $region56
        $region55: #{tpu_custom_call.1} parent=39 // pred_region
          %312 = dma.done [#allocation10], 64
        $region56: #{tpu_custom_call.1} parent=39 // pred_fallthru
          _
        %s313 = sand.u32 %s46, 1
        %s314 = scalar_lea.sflag [#allocation4], %s313
        %s315 = sand.u32 %s46, 1
        %s316 = smul.addr %s315, 2
        %s317 = scalar_lea.vmem [#allocation3], %s316
        %p318 = pneg %p59
        %p319 = pneg %p56
        %s320 = sand.u32 %s26, 1
        %s321 = scalar_lea.sflag [#allocation7], %s320
        %s322 = sand.u32 %s74, 1
        %s323 = smul.addr %s322, 256
        %s324 = scalar_lea.vmem [#allocation6], %s323
        %p325 = pneg %p87
        %p326 = pneg %p84
        %s327 = sand.u32 %s26, 1
        %s328 = scalar_lea.sflag [#allocation7], %s327
        %s329 = sand.u32 %s100, 1
        %s330 = smul.addr %s329, 4
        %s331 = scalar_lea.vmem [#allocation8], %s330
        %p332 = pneg %p113
        %p333 = pneg %p110
        %p334 = pneg %p134
        %p335 = pneg %p131
        %p336 = pneg %p155
        %p337 = pneg %p152
        %p338 = pneg %p181
        %p339 = pneg %p178
        %s340 = sand.u32 %s168, 1
        %s341 = scalar_lea.sflag [#allocation5], %s340
        %s342 = sand.u32 %s168, 1
        %s343 = smul.addr %s342, 8
        %s344 = scalar_lea.vmem [#allocation11], %s343
        %s345 = smul.u32 16, %s31
        %p347 = scmp.eq.s32.totalorder %s31, 0
        // Predicated region
        $region57: #{tpu_custom_call.1} parent=39 // pred_check
          %p348 = pneg %p347
        $region58: #{tpu_custom_call.1} parent=39 // pred_check_branch
          %350 = sbr.rel (%p348) target = $region60
        $region59: #{tpu_custom_call.1} parent=39 // pred_region
          %351 = vst [vmem:[#allocation2] sm:$0xff] 0.0
        $region60: #{tpu_custom_call.1} parent=39 // pred_fallthru
          _
        %v352 = vld [vmem:[%s286] sm:$0x3]
        %v353 = vpack.c.bf16 %v352, %v352
        %v354 = vld [vmem:[%s295] sm:$0xff]
        %v355 = vld [vmem:[%s295 + $0x8] sm:$0xff]
        %v356 = vld [vmem:[%s295 + $0x10] sm:$0xff]
        %v357 = vld [vmem:[%s295 + $0x18] sm:$0xff]
        %v358 = vld [vmem:[%s295 + $0x20] sm:$0xff]
        %v359 = vld [vmem:[%s295 + $0x28] sm:$0xff]
        %v360 = vld [vmem:[%s295 + $0x30] sm:$0xff]
        %v361 = vld [vmem:[%s295 + $0x38] sm:$0xff]
        %v362 = vld [vmem:[%s295 + $0x40] sm:$0xff]
        %v363 = vld [vmem:[%s295 + $0x48] sm:$0xff]
        %v364 = vld [vmem:[%s295 + $0x50] sm:$0xff]
        %v365 = vld [vmem:[%s295 + $0x58] sm:$0xff]
        %v366 = vld [vmem:[%s295 + $0x60] sm:$0xff]
        %v367 = vld [vmem:[%s295 + $0x68] sm:$0xff]
        %v368 = vld [vmem:[%s295 + $0x70] sm:$0xff]
        %v369 = vld [vmem:[%s295 + $0x78] sm:$0xff]
        %v370 = vld [vmem:[%s295 + $0x80] sm:$0xff]
        %v371 = vld [vmem:[%s295 + $0x88] sm:$0xff]
        %v372 = vld [vmem:[%s295 + $0x90] sm:$0xff]
        %v373 = vld [vmem:[%s295 + $0x98] sm:$0xff]
        %v374 = vld [vmem:[%s295 + $0xa0] sm:$0xff]
        %v375 = vld [vmem:[%s295 + $0xa8] sm:$0xff]
        %v376 = vld [vmem:[%s295 + $0xb0] sm:$0xff]
        %v377 = vld [vmem:[%s295 + $0xb8] sm:$0xff]
        %v378 = vld [vmem:[%s295 + $0xc0] sm:$0xff]
        %v379 = vld [vmem:[%s295 + $0xc8] sm:$0xff]
        %v380 = vld [vmem:[%s295 + $0xd0] sm:$0xff]
        %v381 = vld [vmem:[%s295 + $0xd8] sm:$0xff]
        %v382 = vld [vmem:[%s295 + $0xe0] sm:$0xff]
        %v383 = vld [vmem:[%s295 + $0xe8] sm:$0xff]
        %v384 = vld [vmem:[%s295 + $0xf0] sm:$0xff]
        %v385 = vld [vmem:[%s295 + $0xf8] sm:$0xff]
        %v386 = vld [vmem:[#allocation2] sm:$0xff]
        %v419 = vunpack.c.l.b16 %v354
        %v420 = vunpack.c.h.b16 %v354
        %v421 = vunpack.c.l.b16 %v355
        %v422 = vunpack.c.h.b16 %v355
        %v423 = vunpack.c.l.b16 %v356
        %v424 = vunpack.c.h.b16 %v356
        %v425 = vunpack.c.l.b16 %v357
        %v426 = vunpack.c.h.b16 %v357
        %v427 = vunpack.c.l.b16 %v358
        %v428 = vunpack.c.h.b16 %v358
        %v429 = vunpack.c.l.b16 %v359
        %v430 = vunpack.c.h.b16 %v359
        %v431 = vunpack.c.l.b16 %v360
        %v432 = vunpack.c.h.b16 %v360
        %v433 = vunpack.c.l.b16 %v361
        %v434 = vunpack.c.h.b16 %v361
        %v435 = vunpack.c.l.b16 %v362
        %v436 = vunpack.c.h.b16 %v362
        %v437 = vunpack.c.l.b16 %v363
        %v438 = vunpack.c.h.b16 %v363
        %v439 = vunpack.c.l.b16 %v364
        %v440 = vunpack.c.h.b16 %v364
        %v441 = vunpack.c.l.b16 %v365
        %v442 = vunpack.c.h.b16 %v365
        %v443 = vunpack.c.l.b16 %v366
        %v444 = vunpack.c.h.b16 %v366
        %v445 = vunpack.c.l.b16 %v367
        %v446 = vunpack.c.h.b16 %v367
        %v447 = vunpack.c.l.b16 %v368
        %v448 = vunpack.c.h.b16 %v368
        %v449 = vunpack.c.l.b16 %v369
        %v450 = vunpack.c.h.b16 %v369
        %v451 = vunpack.c.l.b16 %v370
        %v452 = vunpack.c.h.b16 %v370
        %v453 = vunpack.c.l.b16 %v371
        %v454 = vunpack.c.h.b16 %v371
        %v455 = vunpack.c.l.b16 %v372
        %v456 = vunpack.c.h.b16 %v372
        %v457 = vunpack.c.l.b16 %v373
        %v458 = vunpack.c.h.b16 %v373
        %v459 = vunpack.c.l.b16 %v374
        %v460 = vunpack.c.h.b16 %v374
        %v461 = vunpack.c.l.b16 %v375
        %v462 = vunpack.c.h.b16 %v375
        %v463 = vunpack.c.l.b16 %v376
        %v464 = vunpack.c.h.b16 %v376
        %v465 = vunpack.c.l.b16 %v377
        %v466 = vunpack.c.h.b16 %v377
        %v467 = vunpack.c.l.b16 %v378
        %v468 = vunpack.c.h.b16 %v378
        %v469 = vunpack.c.l.b16 %v379
        %v470 = vunpack.c.h.b16 %v379
        %v471 = vunpack.c.l.b16 %v380
        %v472 = vunpack.c.h.b16 %v380
        %v473 = vunpack.c.l.b16 %v381
        %v474 = vunpack.c.h.b16 %v381
        %v475 = vunpack.c.l.b16 %v382
        %v476 = vunpack.c.h.b16 %v382
        %v477 = vunpack.c.l.b16 %v383
        %v478 = vunpack.c.h.b16 %v383
        %v479 = vunpack.c.l.b16 %v384
        %v480 = vunpack.c.h.b16 %v384
        %v481 = vunpack.c.l.b16 %v385
        %v482 = vunpack.c.h.b16 %v385
        %v483 = vpack.c.b16 %v423, %v419
        %v484 = vpack.c.b16 %v424, %v420
        %v485 = vpack.c.b16 %v425, %v421
        %v486 = vpack.c.b16 %v426, %v422
        %v487 = vpack.c.b16 %v431, %v427
        %v488 = vpack.c.b16 %v432, %v428
        %v489 = vpack.c.b16 %v433, %v429
        %v490 = vpack.c.b16 %v434, %v430
        %v491 = vpack.c.b16 %v439, %v435
        %v492 = vpack.c.b16 %v440, %v436
        %v493 = vpack.c.b16 %v441, %v437
        %v494 = vpack.c.b16 %v442, %v438
        %v495 = vpack.c.b16 %v447, %v443
        %v496 = vpack.c.b16 %v448, %v444
        %v497 = vpack.c.b16 %v449, %v445
        %v498 = vpack.c.b16 %v450, %v446
        %v499 = vpack.c.b16 %v455, %v451
        %v500 = vpack.c.b16 %v456, %v452
        %v501 = vpack.c.b16 %v457, %v453
        %v502 = vpack.c.b16 %v458, %v454
        %v503 = vpack.c.b16 %v463, %v459
        %v504 = vpack.c.b16 %v464, %v460
        %v505 = vpack.c.b16 %v465, %v461
        %v506 = vpack.c.b16 %v466, %v462
        %v507 = vpack.c.b16 %v471, %v467
        %v508 = vpack.c.b16 %v472, %v468
        %v509 = vpack.c.b16 %v473, %v469
        %v510 = vpack.c.b16 %v474, %v470
        %v511 = vpack.c.b16 %v479, %v475
        %v512 = vpack.c.b16 %v480, %v476
        %v513 = vpack.c.b16 %v481, %v477
        %v514 = vpack.c.b16 %v482, %v478
        %547 = vmatprep.subr.bf16.mxu0 %v512
        %548 = vmatpush1.bf16.msra.mxu0 %v511
        %549 = vmatprep.subr.bf16.mxu0 %v508
        %550 = vmatpush1.bf16.msra.mxu0 %v507
        %551 = vmatprep.subr.bf16.mxu0 %v504
        %552 = vmatpush1.bf16.msra.mxu0 %v503
        %553 = vmatprep.subr.bf16.mxu0 %v500
        %554 = vmatpush1.bf16.msra.mxu0 %v499
        %555 = vmatprep.subr.bf16.mxu0 %v496
        %556 = vmatpush1.bf16.msra.mxu0 %v495
        %557 = vmatprep.subr.bf16.mxu0 %v492
        %558 = vmatpush1.bf16.msra.mxu0 %v491
        %559 = vmatprep.subr.bf16.mxu0 %v488
        %560 = vmatpush1.bf16.msra.mxu0 %v487
        %561 = vmatprep.subr.bf16.mxu0 %v484
        %562 = vmatpush1.bf16.msra.mxu0 %v483
        %563 = vmatprep.subr.bf16.mxu0 0
        %564 = vmatpush2.bf16.msra.mxu0 0
        %565 = vmatprep.subr.bf16.mxu0 0
        %566 = vmatpush2.bf16.msra.mxu0 0
        %567 = vmatprep.subr.bf16.mxu0 0
        %568 = vmatpush2.bf16.msra.mxu0 0
        %569 = vmatprep.subr.bf16.mxu0 0
        %570 = vmatpush2.bf16.msra.mxu0 0
        %571 = vmatprep.subr.bf16.mxu0 0
        %572 = vmatpush2.bf16.msra.mxu0 0
        %573 = vmatprep.subr.bf16.mxu0 0
        %574 = vmatpush2.bf16.msra.mxu0 0
        %575 = vmatprep.subr.bf16.mxu0 0
        %576 = vmatpush2.bf16.msra.mxu0 0
        %577 = vmatprep.subr.bf16.mxu0 0
        %578 = vmatpush2.bf16.msra.mxu0 0
        %579 = vmatprep.mubr.bf16.mxu0 0
        %580 = vmatmul.mubr.bf16.gmra.mxu0 %v353
        %v581 = vpop.f32.mrf.mxu0
        %v582 = vadd.f32 0.0, %v581
        %v583 = vpop.f32.mrf.mxu0
        %v584 = vadd.f32 0.0, %v583
        %v585 = vpop.f32.mrf.mxu0
        %v586 = vpop.f32.mrf.mxu0
        %587 = vdwg.mxu0
        %588 = vmatprep.subr.bf16.mxu0 %v514
        %589 = vmatpush1.bf16.msra.mxu0 %v513
        %590 = vmatprep.subr.bf16.mxu0 %v510
        %591 = vmatpush1.bf16.msra.mxu0 %v509
        %592 = vmatprep.subr.bf16.mxu0 %v506
        %593 = vmatpush1.bf16.msra.mxu0 %v505
        %594 = vmatprep.subr.bf16.mxu0 %v502
        %595 = vmatpush1.bf16.msra.mxu0 %v501
        %596 = vmatprep.subr.bf16.mxu0 %v498
        %597 = vmatpush1.bf16.msra.mxu0 %v497
        %598 = vmatprep.subr.bf16.mxu0 %v494
        %599 = vmatpush1.bf16.msra.mxu0 %v493
        %600 = vmatprep.subr.bf16.mxu0 %v490
        %601 = vmatpush1.bf16.msra.mxu0 %v489
        %602 = vmatprep.subr.bf16.mxu0 %v486
        %603 = vmatpush1.bf16.msra.mxu0 %v485
        %604 = vmatprep.subr.bf16.mxu0 0
        %605 = vmatpush2.bf16.msra.mxu0 0
        %606 = vmatprep.subr.bf16.mxu0 0
        %607 = vmatpush2.bf16.msra.mxu0 0
        %608 = vmatprep.subr.bf16.mxu0 0
        %609 = vmatpush2.bf16.msra.mxu0 0
        %610 = vmatprep.subr.bf16.mxu0 0
        %611 = vmatpush2.bf16.msra.mxu0 0
        %612 = vmatprep.subr.bf16.mxu0 0
        %613 = vmatpush2.bf16.msra.mxu0 0
        %614 = vmatprep.subr.bf16.mxu0 0
        %615 = vmatpush2.bf16.msra.mxu0 0
        %616 = vmatprep.subr.bf16.mxu0 0
        %617 = vmatpush2.bf16.msra.mxu0 0
        %618 = vmatprep.subr.bf16.mxu0 0
        %619 = vmatpush2.bf16.msra.mxu0 0
        %620 = vmatprep.mubr.bf16.mxu0 0
        %621 = vmatmul.mubr.bf16.gmra.mxu0 %v353
        %v622 = vpop.f32.mrf.mxu0
        %v623 = vadd.f32 0.0, %v622
        %v624 = vpop.f32.mrf.mxu0
        %v625 = vadd.f32 0.0, %v624
        %v626 = vpop.f32.mrf.mxu0
        %v627 = vpop.f32.mrf.mxu0
        %628 = vdwg.mxu0
        %v633 = vcombine.low %v582, %v584
        %v634 = vcombine.low %v623, %v625
        %v636 = vunpack.c.l.s4 1983009808
        %v637 = vunpack.c.0.s8 %v636
        %v638 = vlaneseq
        %v639 = vshrl.u32 %v638, 7
        %v640 = vsub.s32 %v637, %v639
        %v641 = vrot.slane %v633, %v640
        %v643 = vunpack.c.l.s4 1983009808
        %v644 = vunpack.c.0.s8 %v643
        %v645 = vlaneseq
        %v646 = vshrl.u32 %v645, 7
        %v647 = vsub.s32 %v644, %v646
        %v648 = vrot.slane %v634, %v647
        %v649 = vcombine.low %v641, %v648
        %v651 = vadd.f32 %v386, %v649
        %652 = vst [vmem:[#allocation2] sm:$0xff] %v651
        %p653 = scmp.eq.s32.totalorder %s31, 1
        // Predicated region
        $region61: #{tpu_custom_call.1} parent=39 // pred_check
          %p654 = pneg %p653
        $region62: #{tpu_custom_call.1} parent=39 // pred_check_branch
          %656 = sbr.rel (%p654) target = $region64
        $region63: #{tpu_custom_call.1} parent=39 // pred_region
          %v657 = vld [vmem:[#allocation2] sm:$0xff]
          %v658 = vld [vmem:[%s304] sm:$0xf]
          %v660 = vlaneseq
          %v661 = vshrl.u32 %v660, 7
          %v662 = vsub.s32 0, %v661
          %v663 = vrot.slane %v658, %v662
          %v664 = vlaneseq
          %v665 = vshrl.u32 %v664, 7
          %v666 = vsub.s32 1, %v665
          %v667 = vrot.slane %v658, %v666
          %v668 = vlaneseq
          %v669 = vshrl.u32 %v668, 7
          %v670 = vsub.s32 2, %v669
          %v671 = vrot.slane %v658, %v670
          %v672 = vlaneseq
          %v673 = vshrl.u32 %v672, 7
          %v674 = vsub.s32 3, %v673
          %v675 = vrot.slane %v658, %v674
          %v676 = vcombine.low %v663, %v667
          %v677 = vcombine.low %v671, %v675
          %v679 = vunpack.c.l.s4 1983009808
          %v680 = vunpack.c.0.s8 %v679
          %v681 = vlaneseq
          %v682 = vshrl.u32 %v681, 7
          %v683 = vsub.s32 %v680, %v682
          %v684 = vrot.slane %v676, %v683
          %v686 = vunpack.c.l.s4 1983009808
          %v687 = vunpack.c.0.s8 %v686
          %v688 = vlaneseq
          %v689 = vshrl.u32 %v688, 7
          %v690 = vsub.s32 %v687, %v689
          %v691 = vrot.slane %v677, %v690
          %v692 = vcombine.low %v684, %v691
          %v694 = vadd.f32 %v657, %v692
          %v696 = vcombine.high %v694, %v694
          %v698 = vunpack.c.l.s4 1983009808
          %v699 = vunpack.c.0.s8 %v698
          %v700 = vlaneseq
          %v701 = vshrl.u32 %v700, 7
          %v702 = vsub.s32 %v699, %v701
          %v703 = vrot.slane %v694, %v702
          %v705 = vunpack.c.l.s4 1983009808
          %v706 = vunpack.c.0.s8 %v705
          %v707 = vlaneseq
          %v708 = vshrl.u32 %v707, 7
          %v709 = vsub.s32 %v706, %v708
          %v710 = vrot.slane %v696, %v709
          %v711 = vcombine.high %v703, %v703
          %v712 = vcombine.high %v710, %v710
          %vm717 = vcmask 1041408
          %v718 = vsel %vm717, %v703, 0.0
          %v719 = vsel %vm717, %v711, 0.0
          %v720 = vadd.f32 %v718, %v719
          %v721 = vsel %vm717, %v710, 0.0
          %v722 = vadd.f32 %v720, %v721
          %v723 = vsel %vm717, %v712, 0.0
          %v724 = vadd.f32 %v722, %v723
          %725 = vadd.xlane.f32.xlu0 %v724
          %v726 = vpop.xlane.xlu0 %725
          %v727 = vmul.f32 %v726, 0.001953125
          %v730 = vunpack.c.l.s4 269488144
          %v731 = vunpack.c.0.s8 %v730
          %v732 = vlaneseq
          %v733 = vshrl.u32 %v732, 7
          %v734 = vsub.s32 %v731, %v733
          %v735 = vrot.slane %v727, %v734
          %v737 = vsub.f32 %v694, %v735
          %v738 = vmul.f32 %v737, %v737
          %v740 = vcombine.high %v738, %v738
          %v742 = vunpack.c.l.s4 1983009808
          %v743 = vunpack.c.0.s8 %v742
          %v744 = vlaneseq
          %v745 = vshrl.u32 %v744, 7
          %v746 = vsub.s32 %v743, %v745
          %v747 = vrot.slane %v738, %v746
          %v749 = vunpack.c.l.s4 1983009808
          %v750 = vunpack.c.0.s8 %v749
          %v751 = vlaneseq
          %v752 = vshrl.u32 %v751, 7
          %v753 = vsub.s32 %v750, %v752
          %v754 = vrot.slane %v740, %v753
          %v755 = vcombine.high %v747, %v747
          %v756 = vcombine.high %v754, %v754
          %v761 = vsel %vm717, %v747, 0.0
          %v762 = vsel %vm717, %v755, 0.0
          %v763 = vadd.f32 %v761, %v762
          %v764 = vsel %vm717, %v754, 0.0
          %v765 = vadd.f32 %v763, %v764
          %v766 = vsel %vm717, %v756, 0.0
          %v767 = vadd.f32 %v765, %v766
          %768 = vadd.xlane.f32.xlu0 %v767
          %v769 = vpop.xlane.xlu0 %768
          %v770 = vmul.f32 %v769, 0.001953125
          %v771 = vadd.f32 %v770, 1e-05
          %v772 = vrsqrt.pop %v771
          %v775 = vunpack.c.l.s4 269488144
          %v776 = vunpack.c.0.s8 %v775
          %v777 = vlaneseq
          %v778 = vshrl.u32 %v777, 7
          %v779 = vsub.s32 %v776, %v778
          %v780 = vrot.slane %v772, %v779
          %v782 = vmul.f32 %v737, %v780
          %v783 = vld [vmem:[%s3] sm:$0xf]
          %v785 = vlaneseq
          %v786 = vshrl.u32 %v785, 7
          %v787 = vsub.s32 0, %v786
          %v788 = vrot.slane %v783, %v787
          %v789 = vlaneseq
          %v790 = vshrl.u32 %v789, 7
          %v791 = vsub.s32 1, %v790
          %v792 = vrot.slane %v783, %v791
          %v793 = vlaneseq
          %v794 = vshrl.u32 %v793, 7
          %v795 = vsub.s32 2, %v794
          %v796 = vrot.slane %v783, %v795
          %v797 = vlaneseq
          %v798 = vshrl.u32 %v797, 7
          %v799 = vsub.s32 3, %v798
          %v800 = vrot.slane %v783, %v799
          %v801 = vcombine.low %v788, %v792
          %v802 = vcombine.low %v796, %v800
          %v804 = vunpack.c.l.s4 1983009808
          %v805 = vunpack.c.0.s8 %v804
          %v806 = vlaneseq
          %v807 = vshrl.u32 %v806, 7
          %v808 = vsub.s32 %v805, %v807
          %v809 = vrot.slane %v801, %v808
          %v811 = vunpack.c.l.s4 1983009808
          %v812 = vunpack.c.0.s8 %v811
          %v813 = vlaneseq
          %v814 = vshrl.u32 %v813, 7
          %v815 = vsub.s32 %v812, %v814
          %v816 = vrot.slane %v802, %v815
          %v817 = vcombine.low %v809, %v816
          %v819 = vmul.f32 %v782, %v817
          %v820 = vld [vmem:[#allocation9] sm:$0xf]
          %v822 = vlaneseq
          %v823 = vshrl.u32 %v822, 7
          %v824 = vsub.s32 0, %v823
          %v825 = vrot.slane %v820, %v824
          %v826 = vlaneseq
          %v827 = vshrl.u32 %v826, 7
          %v828 = vsub.s32 1, %v827
          %v829 = vrot.slane %v820, %v828
          %v830 = vlaneseq
          %v831 = vshrl.u32 %v830, 7
          %v832 = vsub.s32 2, %v831
          %v833 = vrot.slane %v820, %v832
          %v834 = vlaneseq
          %v835 = vshrl.u32 %v834, 7
          %v836 = vsub.s32 3, %v835
          %v837 = vrot.slane %v820, %v836
          %v838 = vcombine.low %v825, %v829
          %v839 = vcombine.low %v833, %v837
          %v841 = vunpack.c.l.s4 1983009808
          %v842 = vunpack.c.0.s8 %v841
          %v843 = vlaneseq
          %v844 = vshrl.u32 %v843, 7
          %v845 = vsub.s32 %v842, %v844
          %v846 = vrot.slane %v838, %v845
          %v848 = vunpack.c.l.s4 1983009808
          %v849 = vunpack.c.0.s8 %v848
          %v850 = vlaneseq
          %v851 = vshrl.u32 %v850, 7
          %v852 = vsub.s32 %v849, %v851
          %v853 = vrot.slane %v839, %v852
          %v854 = vcombine.low %v846, %v853
          %v856 = vadd.f32 %v819, %v854
          %857 = vst [vmem:[%s344] sm:$0xff] %v856
        $region64: #{tpu_custom_call.1} parent=39 // pred_fallthru
          _
        %s858 = sand.u32 %s168, 1
        %s859 = scalar_lea.sflag [#allocation5], %s858
        %s860 = sand.u32 %s168, 1
        %s861 = smul.addr %s860, 8
        %s862 = scalar_lea.vmem [#allocation11], %s861
        // Predicated region
        $region65: #{tpu_custom_call.1} parent=39 // pred_check
          %p863 = pneg %p178
        $region66: #{tpu_custom_call.1} parent=39 // pred_check_branch
          %865 = sbr.rel (%p863) target = $region68
        $region67: #{tpu_custom_call.1} parent=39 // pred_region
          %s867 = ssub.s32 128, 128
          %868 = vsyncadd %s859, %s867
          %s869 = smul.addr %s30, 4
          %s870 = smul.addr %s869, 32
          %s871 = scalar_lea.hbm %s5, %s870
          %s873 = sshll.u32 %s862, 4
          %s874 = int_to_ptr.vmem [resolvable:$true] %s873
          %876 = dma.vmem_to_hbm [thread:$0]  %s874, 128, %s871, %s859
        $region68: #{tpu_custom_call.1} parent=39 // pred_fallthru
          _
      $region40: #{tpu_custom_call.1} parent=5 // pred_fallthru
        _
      %p877 = scmp.le.s32.totalorder 2, %s21
      // Predicated region
      $region69: #{tpu_custom_call.1} parent=5 // pred_check
        %p878 = pneg %p877
      $region70: #{tpu_custom_call.1} parent=5 // pred_check_branch
        %880 = sbr.rel (%p878) target = $region72
      $region71: #{tpu_custom_call.1} parent=5 // pred_region
        %s881 = ssub.s32 %s21, 2
        // Predicated region
        $region73: #{tpu_custom_call.1} parent=71 // pred_check
          %p882 = pneg %p184
        $region74: #{tpu_custom_call.1} parent=71 // pred_check_branch
          %884 = sbr.rel (%p882) target = $region76
        $region75: #{tpu_custom_call.1} parent=71 // pred_region
          %s885 = sand.u32 %s169, 1
          %s886 = scalar_lea.sflag [#allocation5], %s885
          %s887 = sand.u32 %s169, 1
          %s888 = smul.addr %s887, 8
          %s889 = scalar_lea.vmem [#allocation11], %s888
          %890 = dma.done %s886, 128
        $region76: #{tpu_custom_call.1} parent=71 // pred_fallthru
          _
      $region72: #{tpu_custom_call.1} parent=5 // pred_fallthru
        _
    $region6: #{tpu_custom_call.1} parent=1 // loop_footer
      %s25 = sadd.s32 1, %s21
    $region7: #{tpu_custom_call.1} parent=1 // loop_footer_branch
      %20 = sbr.rel target = $region3
    $region8: #{tpu_custom_call.1} parent=1 // loop_exit
      _
    %891 = vsyncpa [#allocation4], 1
    %s892 = scalar_lea.sflag [#allocation4], 1
    %893 = vsyncpa %s892, 1
    %894 = vsyncpa [#allocation7], 1
    %s895 = scalar_lea.sflag [#allocation7], 1
    %896 = vsyncpa %s895, 1
    %897 = vsyncpa [#allocation10], 1
    %898 = vsyncpa [#allocation5], 1
    %s899 = scalar_lea.sflag [#allocation5], 1
    %900 = vsyncpa %s899, 1

</llo_original>
